<compile_context>
chip_gen: v7x
topology: tpu7x:2x2x1
jax: 0.10.0
libtpu: 0.0.40
codegen_flags: <defaults>
</compile_context>

<pallas_src>
import jax
import jax.numpy as jnp
from jax import lax
from jax.experimental import pallas as pl
from jax.experimental.pallas import tpu as pltpu


def _round_up(x, m):
    return (x + m - 1) // m * m


def discriminator_kernel(x_ref, w1_ref, b1_ref, w2_ref, b2_ref, w3_ref, b3_ref,
                         out_ref):
    # x_ref: (TB, S) raw f32 batch tile (batch-major, as stored in HBM).
    # In-kernel cast to the MXU compute dtype (bf16 by default).
    x = x_ref[...].astype(w1_ref.dtype)

    # Layer 1: contract W1 (H_pad, S) with x (TB, S) over S (trans_b form) so
    # the result is (H_pad, TB) with the batch on the LANE axis; f32 accum.
    h1 = lax.dot_general(w1_ref[...], x,
                         dimension_numbers=(((1,), (1,)), ((), ())),
                         preferred_element_type=jnp.float32)
    h1 = h1 + b1_ref[...]                     # (H_pad, 1) broadcast over lanes
    h1 = jnp.maximum(h1, 0.1 * h1)            # LeakyReLU(0.1), 2 VALU ops

    # Layer 2: (H2_pad, H_pad) @ (H_pad, TB) -> (H2_pad, TB), f32 accum.
    h2 = jnp.dot(w2_ref[...], h1.astype(w2_ref.dtype),
                 preferred_element_type=jnp.float32)
    h2 = h2 + b2_ref[...]
    h2 = jnp.maximum(h2, 0.1 * h2)

    # Layer 3 (out_features == 1): VPU multiply + sublane reduction instead of
    # an N=1 MXU matmul; result is a lane-dense (1, TB) row.
    logits = jnp.sum(h2 * w3_ref[...], axis=0, keepdims=True)     # (1, TB)
    out_ref[...] = (logits + b3_ref[0]).astype(out_ref.dtype)


def discriminator_forward(state, params, *, block_b=2048,
                          compute_dtype=jnp.bfloat16):
    """state: (B, state_dim) float32.  params: PyTorch-layout (out, in) weights."""
    B, S = state.shape
    W1, b1 = params["W1"], params["b1"]          # (H, S),  (H,)
    W2, b2 = params["W2"], params["b2"]          # (H2, H), (H2,)
    W3, b3 = params["W3"], params["b3"]          # (1, H2), (1,)
    H, H2 = W1.shape[0], W2.shape[0]

    # Pad hidden dims: bf16 packs 2 rows/sublane -> pad to 16; f32 -> 8.
    w_itemsize = jnp.dtype(compute_dtype).itemsize
    pad_mult = 16 if w_itemsize == 2 else 8
    H_pad = _round_up(H, pad_mult)
    H2_pad = _round_up(H2, pad_mult)

    # Batch tile: multiple of 128 (lane width).  Aim for >= 2 grid steps when
    # the batch allows it so v7x's two TensorCores both get "parallel" work.
    B_ru = _round_up(B, 128)
    half = _round_up(pl.cdiv(B_ru, 2), 128)
    TB = max(128, min(_round_up(block_b, 128), half))
    B_pad = _round_up(B, TB)
    grid = (B_pad // TB,)

    # Stream x raw; pad the batch only when it doesn't divide TB.
    x = state
    if B_pad != B:
        x = jnp.pad(x, ((0, B_pad - B), (0, 0)))

    # Resident (per-call) operands: small, zero-padded once here.  The padded
    # rows/cols carry zeros so they contribute nothing downstream.
    w1p = jnp.pad(W1.astype(compute_dtype), ((0, H_pad - H), (0, 0)))        # (H_pad, S)
    w2p = jnp.pad(W2.astype(compute_dtype), ((0, H2_pad - H2), (0, H_pad - H)))
    w3p = jnp.pad(W3.astype(jnp.float32).reshape(H2, 1), ((0, H2_pad - H2), (0, 0)))
    b1p = jnp.pad(b1.astype(jnp.float32).reshape(H, 1), ((0, H_pad - H), (0, 0)))
    b2p = jnp.pad(b2.astype(jnp.float32).reshape(H2, 1), ((0, H2_pad - H2), (0, 0)))
    b3p = b3.astype(jnp.float32).reshape(1)                                   # SMEM scalar

    def resident(arr):
        return pl.BlockSpec(arr.shape, lambda i: (0, 0))

    # Per-step VMEM footprint (double-buffered streams + resident weights +
    # f32 intermediates).  Keep the scoped budget within v7x's 64 MiB.
    per_step_vmem = (2 * TB * S * 4                               # x tiles (f32)
                     + 2 * TB * 4                                 # (1, TB) out tiles
                     + (H_pad * S + H2_pad * H_pad) * w_itemsize  # weights
                     + (H_pad + H2_pad + H2_pad + 8) * 4          # biases + w3 col
                     + (H_pad + H2_pad) * TB * 4)                 # h1/h2 f32
    vmem_limit = int(min(64 * 1024 * 1024,
                         max(32 * 1024 * 1024, 2 * per_step_vmem)))

    flops = 2 * B_pad * (S * H_pad + H_pad * H2_pad + H2_pad)
    bytes_accessed = (B_pad * S * 4                               # raw x stream
                      + (w1p.size + w2p.size) * w_itemsize        # resident weights
                      + (w3p.size + b1p.size + b2p.size + 1) * 4
                      + B_pad * 4)                                # logits out

    out = pl.pallas_call(
        discriminator_kernel,
        out_shape=jax.ShapeDtypeStruct((1, B_pad), jnp.float32),
        grid=grid,
        in_specs=[
            pl.BlockSpec((TB, S), lambda i: (i, 0)),            # raw x tile (streamed)
            resident(w1p), resident(b1p),
            resident(w2p), resident(b2p),
            resident(w3p),
            pl.BlockSpec(memory_space=pltpu.MemorySpace.SMEM),  # b3 scalar
        ],
        out_specs=pl.BlockSpec((1, TB), lambda i: (0, i)),      # lane-dense logits
        compiler_params=pltpu.CompilerParams(
            dimension_semantics=("parallel",),
            vmem_limit_bytes=vmem_limit),
        cost_estimate=pl.CostEstimate(flops=int(flops), transcendentals=0,
                                      bytes_accessed=int(bytes_accessed)),
    )(x, w1p, b1p, w2p, b2p, w3p, b3p)

    return out[0, :B].reshape(B, 1).astype(jnp.float32)


def init_params(key, state_dim, hidden_dim):
    """PyTorch nn.Linear-style init; weights stored (out_features, in_features)."""
    half = hidden_dim // 2
    keys = jax.random.split(key, 6)

    def lin(kw, kb, fan_in, fan_out):
        bound = 1.0 / (fan_in ** 0.5)
        w = jax.random.uniform(kw, (fan_out, fan_in), jnp.float32, -bound, bound)
        b = jax.random.uniform(kb, (fan_out,), jnp.float32, -bound, bound)
        return w, b

    W1, b1 = lin(keys[0], keys[1], state_dim, hidden_dim)
    W2, b2 = lin(keys[2], keys[3], hidden_dim, half)
    W3, b3 = lin(keys[4], keys[5], half, 1)
    return {"W1": W1, "b1": b1, "W2": W2, "b2": b2, "W3": W3, "b3": b3}


def reference_forward(state, p):
    hp = jax.lax.Precision.HIGHEST
    h1 = jnp.dot(state, p["W1"].T, precision=hp) + p["b1"]
    h1 = jnp.where(h1 > 0, h1, 0.1 * h1)
    h2 = jnp.dot(h1, p["W2"].T, precision=hp) + p["b2"]
    h2 = jnp.where(h2 > 0, h2, 0.1 * h2)
    return jnp.dot(h2, p["W3"].T, precision=hp) + p["b3"]


if __name__ == "__main__":
    # hidden_dim=100 matches the module; state_dim ~ a MuJoCo observation dim.
    # B=200 spans two 128-row batch tiles, exercising the grid / padding paths.
    B, state_dim, hidden_dim = 200, 17, 100

    key = jax.random.PRNGKey(0)
    k_state, k_params = jax.random.split(key)
    state = jax.random.normal(k_state, (B, state_dim), dtype=jnp.float32)
    params = init_params(k_params, state_dim, hidden_dim)

    expected = reference_forward(state, params)

    # Default (bf16 MXU inputs, f32 accumulation / VPU math) path.
    validity = jax.block_until_ready(discriminator_forward(state, params))
    assert validity.shape == (B, 1)
    err_bf16 = float(jnp.max(jnp.abs(validity - expected)))
    assert jnp.allclose(validity, expected, atol=5e-2, rtol=5e-2), err_bf16

    # Full f32 compute path (tighter check).
    validity_f32 = jax.block_until_ready(
        discriminator_forward(state, params, compute_dtype=jnp.float32))
    err_f32 = float(jnp.max(jnp.abs(validity_f32 - expected)))
    assert jnp.allclose(validity_f32, expected, atol=1e-2, rtol=1e-2), err_f32

    print("KERNEL_OK")
</pallas_src>

<mosaic_0001>
module attributes {stable_mosaic.version = 11 : i64} {
  func.func @discriminator_kernel(%arg0: i32, %arg1: memref<128x17xf32, #tpu.memory_space<vmem>>, %arg2: memref<112x17xbf16, #tpu.memory_space<vmem>>, %arg3: memref<112x1xf32, #tpu.memory_space<vmem>>, %arg4: memref<64x112xbf16, #tpu.memory_space<vmem>>, %arg5: memref<64x1xf32, #tpu.memory_space<vmem>>, %arg6: memref<64x1xf32, #tpu.memory_space<vmem>>, %arg7: memref<1xf32, #tpu.memory_space<smem>>, %arg8: memref<1x128xf32, #tpu.memory_space<vmem>>) attributes {dimension_semantics = [#tpu.dimension_semantics<parallel>], iteration_bounds = array<i64: 2>, scalar_prefetch = 0 : i64, scratch_operands = 0 : i64, tpu.core_type = #tpu.core_type<tc>, window_params = [{transform_indices = @transform_0, window_bounds = array<i64: 128, 17>}, {pipeline_mode = #tpu.pipeline_mode<synchronous>, transform_indices = @transform_1, window_bounds = array<i64: 112, 17>}, {pipeline_mode = #tpu.pipeline_mode<synchronous>, transform_indices = @transform_2, window_bounds = array<i64: 112, 1>}, {pipeline_mode = #tpu.pipeline_mode<synchronous>, transform_indices = @transform_3, window_bounds = array<i64: 64, 112>}, {pipeline_mode = #tpu.pipeline_mode<synchronous>, transform_indices = @transform_4, window_bounds = array<i64: 64, 1>}, {pipeline_mode = #tpu.pipeline_mode<synchronous>, transform_indices = @transform_5, window_bounds = array<i64: 64, 1>}, {transform_indices = @transform_6, window_bounds = array<i64: 1>}, {transform_indices = @transform_7, window_bounds = array<i64: 1, 128>}]} {
    %c0 = arith.constant 0 : index
    %c0_0 = arith.constant 0 : index
    %0 = vector.load %arg1[%c0, %c0_0] : memref<128x17xf32, #tpu.memory_space<vmem>>, vector<128x17xf32>
    %1 = arith.truncf %0 : vector<128x17xf32> to vector<128x17xbf16>
    %c0_1 = arith.constant 0 : index
    %c0_2 = arith.constant 0 : index
    %2 = vector.load %arg2[%c0_1, %c0_2] : memref<112x17xbf16, #tpu.memory_space<vmem>>, vector<112x17xbf16>
    %cst = arith.constant dense<0.000000e+00> : vector<112x128xf32>
    %3 = tpu.matmul %2, %1, %cst {dimension_numbers = #tpu.dot_dimension_numbers<[1], [1], [0], [0], [0, 0, 1, 0], [], []>} : vector<112x17xbf16>, vector<128x17xbf16>, vector<112x128xf32> -> vector<112x128xf32>
    %c0_3 = arith.constant 0 : index
    %c0_4 = arith.constant 0 : index
    %4 = vector.load %arg3[%c0_3, %c0_4] : memref<112x1xf32, #tpu.memory_space<vmem>>, vector<112x1xf32>
    %5 = vector.broadcast %4 : vector<112x1xf32> to vector<112x128xf32>
    %6 = arith.addf %3, %5 : vector<112x128xf32>
    %cst_5 = arith.constant 1.000000e-01 : f32
    %7 = vector.broadcast %cst_5 : f32 to vector<112x128xf32>
    %8 = arith.mulf %7, %6 : vector<112x128xf32>
    %9 = arith.maximumf %6, %8 : vector<112x128xf32>
    %c0_6 = arith.constant 0 : index
    %c0_7 = arith.constant 0 : index
    %10 = vector.load %arg4[%c0_6, %c0_7] : memref<64x112xbf16, #tpu.memory_space<vmem>>, vector<64x112xbf16>
    %11 = arith.truncf %9 : vector<112x128xf32> to vector<112x128xbf16>
    %cst_8 = arith.constant dense<0.000000e+00> : vector<64x128xf32>
    %12 = tpu.matmul %10, %11, %cst_8 {dimension_numbers = #tpu.dot_dimension_numbers<[1], [0], [0], [1], [0, 0, 1, 1], [], []>} : vector<64x112xbf16>, vector<112x128xbf16>, vector<64x128xf32> -> vector<64x128xf32>
    %c0_9 = arith.constant 0 : index
    %c0_10 = arith.constant 0 : index
    %13 = vector.load %arg5[%c0_9, %c0_10] : memref<64x1xf32, #tpu.memory_space<vmem>>, vector<64x1xf32>
    %14 = vector.broadcast %13 : vector<64x1xf32> to vector<64x128xf32>
    %15 = arith.addf %12, %14 : vector<64x128xf32>
    %cst_11 = arith.constant 1.000000e-01 : f32
    %16 = vector.broadcast %cst_11 : f32 to vector<64x128xf32>
    %17 = arith.mulf %16, %15 : vector<64x128xf32>
    %18 = arith.maximumf %15, %17 : vector<64x128xf32>
    %c0_12 = arith.constant 0 : index
    %c0_13 = arith.constant 0 : index
    %19 = vector.load %arg6[%c0_12, %c0_13] : memref<64x1xf32, #tpu.memory_space<vmem>>, vector<64x1xf32>
    %20 = vector.broadcast %19 : vector<64x1xf32> to vector<64x128xf32>
    %21 = arith.mulf %18, %20 : vector<64x128xf32>
    %cst_14 = arith.constant dense<0.000000e+00> : vector<128xf32>
    %22 = vector.multi_reduction <add>, %21, %cst_14 [0] : vector<64x128xf32> to vector<128xf32>
    %23 = vector.shape_cast %22 : vector<128xf32> to vector<1x128xf32>
    %c0_15 = arith.constant 0 : index
    %24 = memref.load %arg7[%c0_15] : memref<1xf32, #tpu.memory_space<smem>>
    %25 = vector.broadcast %24 : f32 to vector<1x128xf32>
    %26 = arith.addf %23, %25 : vector<1x128xf32>
    %c0_16 = arith.constant 0 : index
    %c0_17 = arith.constant 0 : index
    %27 = vector.load %arg8[%c0_16, %c0_17] : memref<1x128xf32, #tpu.memory_space<vmem>>, vector<1x128xf32>
    tpu.vector_store %arg8[%c0_16, %c0_17], %26 {strides = array<i32>} : memref<1x128xf32, #tpu.memory_space<vmem>>, vector<1x128xf32>,
    return
  }
  func.func @transform_0(%arg0: i32) -> (i32, i32) {
    %c0_i32 = arith.constant 0 : i32
    %c0_i32_0 = arith.constant 0 : i32
    return %arg0, %c0_i32 : i32, i32
  }
  func.func @transform_1(%arg0: i32) -> (i32, i32) {
    %c0_i32 = arith.constant 0 : i32
    %c0_i32_0 = arith.constant 0 : i32
    %c0_i32_1 = arith.constant 0 : i32
    return %c0_i32, %c0_i32_0 : i32, i32
  }
  func.func @transform_2(%arg0: i32) -> (i32, i32) {
    %c0_i32 = arith.constant 0 : i32
    %c0_i32_0 = arith.constant 0 : i32
    %c0_i32_1 = arith.constant 0 : i32
    return %c0_i32, %c0_i32_0 : i32, i32
  }
  func.func @transform_3(%arg0: i32) -> (i32, i32) {
    %c0_i32 = arith.constant 0 : i32
    %c0_i32_0 = arith.constant 0 : i32
    %c0_i32_1 = arith.constant 0 : i32
    return %c0_i32, %c0_i32_0 : i32, i32
  }
  func.func @transform_4(%arg0: i32) -> (i32, i32) {
    %c0_i32 = arith.constant 0 : i32
    %c0_i32_0 = arith.constant 0 : i32
    %c0_i32_1 = arith.constant 0 : i32
    return %c0_i32, %c0_i32_0 : i32, i32
  }
  func.func @transform_5(%arg0: i32) -> (i32, i32) {
    %c0_i32 = arith.constant 0 : i32
    %c0_i32_0 = arith.constant 0 : i32
    %c0_i32_1 = arith.constant 0 : i32
    return %c0_i32, %c0_i32_0 : i32, i32
  }
  func.func @transform_6(%arg0: i32) -> i32 {
    %c0_i32 = arith.constant 0 : i32
    %c0_i32_0 = arith.constant 0 : i32
    return %c0_i32 : i32
  }
  func.func @transform_7(%arg0: i32) -> (i32, i32) {
    %c0_i32 = arith.constant 0 : i32
    %c0_i32_0 = arith.constant 0 : i32
    return %c0_i32, %arg0 : i32, i32
  }
}

</mosaic_0001>

<llo_original>
// kernel: tpu_custom_call.1
$region0: #{tpu_custom_call.1}
  #allocation0 [shape = 'u32[]', space=smem, size = 0x4, offset = 0x4, fixed_abs, tag = 'smem constant byte address 0x4 - core index']
  #allocation1 [shape = 'u32[144,128]{1,0:T(1,128)}', space=vmem, size = 0x12000, scoped, tag = 'internal scratch']
  #allocation2 [shape = 'f32[1]{0:T(128)S(6)}', space=smem, size = 0x200, scoped, tag = 'scoped memory for tpu_custom_call.1']
  %s0 = inlined_call_operand.vmem [shape: f32[256,17], index: 0, kind: input, shape index: {}]
  %s1 = inlined_call_operand.vmem [shape: bf16[112,17], index: 1, kind: input, shape index: {}]
  %s2 = inlined_call_operand.vmem [shape: f32[112,1], index: 2, kind: input, shape index: {}]
  %s3 = inlined_call_operand.vmem [shape: bf16[64,112], index: 3, kind: input, shape index: {}]
  %s4 = inlined_call_operand.vmem [shape: f32[64,1], index: 4, kind: input, shape index: {}]
  %s5 = inlined_call_operand.vmem [shape: f32[64,1], index: 5, kind: input, shape index: {}]
  %s6 = inlined_call_operand.<no memory space> [shape: f32[1], index: 6, kind: input, shape index: {}]
  %s7 = inlined_call_operand.hbm [shape: f32[1,256], index: 7, kind: output, shape index: {}]
  %s8 = sld [smem:[#allocation0]]
  $region61: #{tpu_custom_call.1} parent=0
    _
  %s10 = ssub.s32 1, %s8
  %s11 = scalar_select 0, %s10, %s8
  %12 = sst [smem:[#allocation2]] %s6
  $region1: #{tpu_custom_call.1} parent=0
    #allocation3 [shape = 'u8[1024]{0}', space=vmem, size = 0x400, scoped, tag = 'output window, operand 0']
    #allocation4 [shape = 's32[2]{0}', space=sflag, size = 0x8, scoped, tag = 'scoped memory for tpu_custom_call.1']
    %13 = vsyncpa [#allocation4], 0
    %s14 = scalar_lea.sflag [#allocation4], 1
    %15 = vsyncpa %s14, 0
    loop: start=0, step=1, limit=4
    $region2: #{tpu_custom_call.1} parent=1 // loop_pre_header
      _
    $region3: #{tpu_custom_call.1} parent=1 // loop_header
      %s17 = sphi 0, %s21
      %p18 = scmp.ge.s32.totalorder %s17, 4
      %s27 = sphi 0, %s29
      %s30 = sphi 0, %s27
      %s31 = sphi 0, %s30
      %s47 = sphi 0, %s31
      %s51 = sphi 0, %s51
      %s53 = sphi 0, %s51
      %s54 = sphi 0, %s53
      %s68 = sphi 0, %s54
      %s72 = sphi 0, %s72
      %s74 = sphi 0, %s72
      %s75 = sphi 0, %s74
      %s89 = sphi 0, %s75
      %s93 = sphi 0, %s93
      %s95 = sphi 0, %s93
      %s96 = sphi 0, %s95
      %s110 = sphi 0, %s96
      %s114 = sphi 0, %s114
      %s116 = sphi 0, %s114
      %s117 = sphi 0, %s116
      %s131 = sphi 0, %s117
      %s135 = sphi 0, %s135
      %s137 = sphi 0, %s135
      %s138 = sphi 0, %s137
      %s152 = sphi 0, %s138
      %s156 = sphi 0, %s156
      %s158 = sphi 0, %s156
      %s159 = sphi 0, %s158
      %s173 = sphi 0, %s159
      %s179 = sphi 0, %s181
      %s182 = sphi 0, %s179
      %s183 = sphi 0, %s182
      %s199 = sphi 0, %s183
    $region4: #{tpu_custom_call.1} parent=1 // loop_header_branch
      %20 = sbr.rel (%p18) target = $region8
    $region5: #{tpu_custom_call.1} parent=1 // loop_body
      %s22 = ssub.s32 %s17, 1
      %s23 = ssub.s32 %s17, 2
      %s24 = sadd.s32 %s17, 1
      %s25 = ssub.s32 %s17, %s24
      %p26 = scmp.eq.s32.totalorder %s25, 0
      %s28 = sadd.s32 %s27, 1
      %s29 = scalar_select %p26, %s27, %s28
      %p32 = pneg %p26
      %p33 = scmp.eq.s32.totalorder %s17, 1
      %p34 = por %p32, %p33
      %p35 = scmp.ne.s32.totalorder %s27, %s30
      %p36 = scmp.eq.s32.totalorder %s17, 0
      %p37 = por %p35, %p36
      %p38 = scmp.ne.s32.totalorder %s27, %s30
      %p39 = scmp.eq.s32.totalorder %s22, 1
      %p40 = por %p38, %p39
      %p41 = scmp.ne.s32.totalorder %s30, %s31
      %p42 = scmp.eq.s32.totalorder %s22, 0
      %p43 = por %p41, %p42
      %p44 = scmp.ne.s32.totalorder %s30, %s31
      %p45 = scmp.eq.s32.totalorder %s23, 1
      %p46 = por %p44, %p45
      %p48 = scmp.ne.s32.totalorder %s31, %s47
      %p49 = scmp.eq.s32.totalorder %s23, 0
      %p50 = por %p48, %p49
      %s52 = sadd.s32 %s51, 1
      %p55 = scmp.eq.s32.totalorder %s17, 1
      %p56 = scmp.ne.s32.totalorder %s51, %s53
      %p57 = scmp.eq.s32.totalorder %s17, 0
      %p58 = por %p56, %p57
      %p59 = scmp.ne.s32.totalorder %s51, %s53
      %p60 = scmp.eq.s32.totalorder %s22, 1
      %p61 = por %p59, %p60
      %p62 = scmp.ne.s32.totalorder %s53, %s54
      %p63 = scmp.eq.s32.totalorder %s22, 0
      %p64 = por %p62, %p63
      %p65 = scmp.ne.s32.totalorder %s53, %s54
      %p66 = scmp.eq.s32.totalorder %s23, 1
      %p67 = por %p65, %p66
      %p69 = scmp.ne.s32.totalorder %s54, %s68
      %p70 = scmp.eq.s32.totalorder %s23, 0
      %p71 = por %p69, %p70
      %s73 = sadd.s32 %s72, 1
      %p76 = scmp.eq.s32.totalorder %s17, 1
      %p77 = scmp.ne.s32.totalorder %s72, %s74
      %p78 = scmp.eq.s32.totalorder %s17, 0
      %p79 = por %p77, %p78
      %p80 = scmp.ne.s32.totalorder %s72, %s74
      %p81 = scmp.eq.s32.totalorder %s22, 1
      %p82 = por %p80, %p81
      %p83 = scmp.ne.s32.totalorder %s74, %s75
      %p84 = scmp.eq.s32.totalorder %s22, 0
      %p85 = por %p83, %p84
      %p86 = scmp.ne.s32.totalorder %s74, %s75
      %p87 = scmp.eq.s32.totalorder %s23, 1
      %p88 = por %p86, %p87
      %p90 = scmp.ne.s32.totalorder %s75, %s89
      %p91 = scmp.eq.s32.totalorder %s23, 0
      %p92 = por %p90, %p91
      %s94 = sadd.s32 %s93, 1
      %p97 = scmp.eq.s32.totalorder %s17, 1
      %p98 = scmp.ne.s32.totalorder %s93, %s95
      %p99 = scmp.eq.s32.totalorder %s17, 0
      %p100 = por %p98, %p99
      %p101 = scmp.ne.s32.totalorder %s93, %s95
      %p102 = scmp.eq.s32.totalorder %s22, 1
      %p103 = por %p101, %p102
      %p104 = scmp.ne.s32.totalorder %s95, %s96
      %p105 = scmp.eq.s32.totalorder %s22, 0
      %p106 = por %p104, %p105
      %p107 = scmp.ne.s32.totalorder %s95, %s96
      %p108 = scmp.eq.s32.totalorder %s23, 1
      %p109 = por %p107, %p108
      %p111 = scmp.ne.s32.totalorder %s96, %s110
      %p112 = scmp.eq.s32.totalorder %s23, 0
      %p113 = por %p111, %p112
      %s115 = sadd.s32 %s114, 1
      %p118 = scmp.eq.s32.totalorder %s17, 1
      %p119 = scmp.ne.s32.totalorder %s114, %s116
      %p120 = scmp.eq.s32.totalorder %s17, 0
      %p121 = por %p119, %p120
      %p122 = scmp.ne.s32.totalorder %s114, %s116
      %p123 = scmp.eq.s32.totalorder %s22, 1
      %p124 = por %p122, %p123
      %p125 = scmp.ne.s32.totalorder %s116, %s117
      %p126 = scmp.eq.s32.totalorder %s22, 0
      %p127 = por %p125, %p126
      %p128 = scmp.ne.s32.totalorder %s116, %s117
      %p129 = scmp.eq.s32.totalorder %s23, 1
      %p130 = por %p128, %p129
      %p132 = scmp.ne.s32.totalorder %s117, %s131
      %p133 = scmp.eq.s32.totalorder %s23, 0
      %p134 = por %p132, %p133
      %s136 = sadd.s32 %s135, 1
      %p139 = scmp.eq.s32.totalorder %s17, 1
      %p140 = scmp.ne.s32.totalorder %s135, %s137
      %p141 = scmp.eq.s32.totalorder %s17, 0
      %p142 = por %p140, %p141
      %p143 = scmp.ne.s32.totalorder %s135, %s137
      %p144 = scmp.eq.s32.totalorder %s22, 1
      %p145 = por %p143, %p144
      %p146 = scmp.ne.s32.totalorder %s137, %s138
      %p147 = scmp.eq.s32.totalorder %s22, 0
      %p148 = por %p146, %p147
      %p149 = scmp.ne.s32.totalorder %s137, %s138
      %p150 = scmp.eq.s32.totalorder %s23, 1
      %p151 = por %p149, %p150
      %p153 = scmp.ne.s32.totalorder %s138, %s152
      %p154 = scmp.eq.s32.totalorder %s23, 0
      %p155 = por %p153, %p154
      %s157 = sadd.s32 %s156, 1
      %p160 = scmp.eq.s32.totalorder %s17, 1
      %p161 = scmp.ne.s32.totalorder %s156, %s158
      %p162 = scmp.eq.s32.totalorder %s17, 0
      %p163 = por %p161, %p162
      %p164 = scmp.ne.s32.totalorder %s156, %s158
      %p165 = scmp.eq.s32.totalorder %s22, 1
      %p166 = por %p164, %p165
      %p167 = scmp.ne.s32.totalorder %s158, %s159
      %p168 = scmp.eq.s32.totalorder %s22, 0
      %p169 = por %p167, %p168
      %p170 = scmp.ne.s32.totalorder %s158, %s159
      %p171 = scmp.eq.s32.totalorder %s23, 1
      %p172 = por %p170, %p171
      %p174 = scmp.ne.s32.totalorder %s159, %s173
      %p175 = scmp.eq.s32.totalorder %s23, 0
      %p176 = por %p174, %p175
      %s177 = ssub.s32 %s17, %s24
      %p178 = scmp.eq.s32.totalorder %s177, 0
      %s180 = sadd.s32 %s179, 1
      %s181 = scalar_select %p178, %s179, %s180
      %p184 = pneg %p178
      %p185 = scmp.eq.s32.totalorder %s17, 1
      %p186 = por %p184, %p185
      %p187 = scmp.ne.s32.totalorder %s179, %s182
      %p188 = scmp.eq.s32.totalorder %s17, 0
      %p189 = por %p187, %p188
      %p190 = scmp.ne.s32.totalorder %s179, %s182
      %p191 = scmp.eq.s32.totalorder %s22, 1
      %p192 = por %p190, %p191
      %p193 = scmp.ne.s32.totalorder %s182, %s183
      %p194 = scmp.eq.s32.totalorder %s22, 0
      %p195 = por %p193, %p194
      %p196 = scmp.ne.s32.totalorder %s182, %s183
      %p197 = scmp.eq.s32.totalorder %s23, 1
      %p198 = por %p196, %p197
      %p200 = scmp.ne.s32.totalorder %s183, %s199
      %p201 = scmp.eq.s32.totalorder %s23, 0
      %p202 = por %p200, %p201
      %p203 = scmp.le.s32.totalorder 1, %s17
      %p204 = scmp.lt.s32.totalorder %s17, 3
      %p205 = pnand %p203, %p204
      %p206 = pneg %p205
      // Predicated region
      $region9: #{tpu_custom_call.1} parent=5 // pred_check
        _
      $region10: #{tpu_custom_call.1} parent=5 // pred_check_branch
        %208 = sbr.rel (%p205) target = $region12
      $region11: #{tpu_custom_call.1} parent=5 // pred_region
        %s209 = ssub.s32 %s17, 1
        // Predicated region
        $region13: #{tpu_custom_call.1} parent=11 // pred_check
          %p210 = pneg %p64
        $region14: #{tpu_custom_call.1} parent=11 // pred_check_branch
          %212 = sbr.rel (%p210) target = $region16
        $region15: #{tpu_custom_call.1} parent=11 // pred_region
          _
        $region16: #{tpu_custom_call.1} parent=11 // pred_fallthru
          _
        // Predicated region
        $region17: #{tpu_custom_call.1} parent=11 // pred_check
          %p213 = pneg %p85
        $region18: #{tpu_custom_call.1} parent=11 // pred_check_branch
          %215 = sbr.rel (%p213) target = $region20
        $region19: #{tpu_custom_call.1} parent=11 // pred_region
          _
        $region20: #{tpu_custom_call.1} parent=11 // pred_fallthru
          _
        // Predicated region
        $region21: #{tpu_custom_call.1} parent=11 // pred_check
          %p216 = pneg %p106
        $region22: #{tpu_custom_call.1} parent=11 // pred_check_branch
          %218 = sbr.rel (%p216) target = $region24
        $region23: #{tpu_custom_call.1} parent=11 // pred_region
          _
        $region24: #{tpu_custom_call.1} parent=11 // pred_fallthru
          _
        // Predicated region
        $region25: #{tpu_custom_call.1} parent=11 // pred_check
          %p219 = pneg %p127
        $region26: #{tpu_custom_call.1} parent=11 // pred_check_branch
          %221 = sbr.rel (%p219) target = $region28
        $region27: #{tpu_custom_call.1} parent=11 // pred_region
          _
        $region28: #{tpu_custom_call.1} parent=11 // pred_fallthru
          _
        // Predicated region
        $region29: #{tpu_custom_call.1} parent=11 // pred_check
          %p222 = pneg %p148
        $region30: #{tpu_custom_call.1} parent=11 // pred_check_branch
          %224 = sbr.rel (%p222) target = $region32
        $region31: #{tpu_custom_call.1} parent=11 // pred_region
          _
        $region32: #{tpu_custom_call.1} parent=11 // pred_fallthru
          _
        // Predicated region
        $region33: #{tpu_custom_call.1} parent=11 // pred_check
          %p225 = pneg %p169
        $region34: #{tpu_custom_call.1} parent=11 // pred_check_branch
          %227 = sbr.rel (%p225) target = $region36
        $region35: #{tpu_custom_call.1} parent=11 // pred_region
          _
        $region36: #{tpu_custom_call.1} parent=11 // pred_fallthru
          _
      $region12: #{tpu_custom_call.1} parent=5 // pred_fallthru
        _
      %p228 = scmp.lt.s32.totalorder %s17, 2
      // Predicated region
      $region37: #{tpu_custom_call.1} parent=5 // pred_check
        %p229 = pneg %p228
      $region38: #{tpu_custom_call.1} parent=5 // pred_check_branch
        %231 = sbr.rel (%p229) target = $region40
      $region39: #{tpu_custom_call.1} parent=5 // pred_region
        // Predicated region
        $region41: #{tpu_custom_call.1} parent=39 // pred_check
          %p232 = pneg %p37
        $region42: #{tpu_custom_call.1} parent=39 // pred_check_branch
          %234 = sbr.rel (%p232) target = $region44
        $region43: #{tpu_custom_call.1} parent=39 // pred_region
          %s235 = smul.u32 16, %s17
          %p236 = scmp.lt.s32.totalorder %s235, 31
          %s237 = scalar_select %p236, %s235, 31
          %s238 = smul.addr %s237, 8
          %s239 = scalar_lea.vmem %s0, %s238
          %s240 = smul.u32 16, %s17
        $region44: #{tpu_custom_call.1} parent=39 // pred_fallthru
          _
      $region40: #{tpu_custom_call.1} parent=5 // pred_fallthru
        _
      %p241 = scmp.le.s32.totalorder 1, %s17
      %p242 = scmp.lt.s32.totalorder %s17, 3
      %p243 = pnand %p241, %p242
      %p244 = pneg %p243
      // Predicated region
      $region45: #{tpu_custom_call.1} parent=5 // pred_check
        _
      $region46: #{tpu_custom_call.1} parent=5 // pred_check_branch
        %246 = sbr.rel (%p243) target = $region48
      $region47: #{tpu_custom_call.1} parent=5 // pred_region
        %s247 = ssub.s32 %s17, 1
        %s248 = smul.u32 16, %s22
        %p249 = scmp.lt.s32.totalorder %s248, 31
        %s250 = scalar_select %p249, %s248, 31
        %s251 = smul.addr %s250, 8
        %s252 = scalar_lea.vmem %s0, %s251
        %p253 = pneg %p43
        %p254 = pneg %p40
        %p255 = pneg %p64
        %p256 = pneg %p61
        %p257 = pneg %p85
        %p258 = pneg %p82
        %p259 = pneg %p106
        %p260 = pneg %p103
        %p261 = pneg %p127
        %p262 = pneg %p124
        %p263 = pneg %p148
        %p264 = pneg %p145
        %p265 = pneg %p169
        %p266 = pneg %p166
        %p267 = pneg %p195
        %p268 = pneg %p192
        %s269 = sand.u32 %s182, 1
        %s270 = scalar_lea.sflag [#allocation4], %s269
        %s271 = sand.u32 %s182, 1
        %s272 = scalar_lea.vmem [#allocation3], %s271
        %s273 = smul.u32 16, %s22
        %p274 = scmp.lt.s32.totalorder %s273, 31
        %s275 = scalar_select %p274, %s273, 31
        %s276 = smul.addr %s275, 8
        %s277 = scalar_lea.vmem %s0, %s276
        %s278 = smul.u32 16, %s22
        %v280 = vld [vmem:[%s277] sm:$0xff]
        %v281 = vld [vmem:[%s277 + $0x8] sm:$0xff]
        %v282 = vld [vmem:[%s277 + $0x10] sm:$0xff]
        %v283 = vld [vmem:[%s277 + $0x18] sm:$0xff]
        %v284 = vld [vmem:[%s277 + $0x20] sm:$0xff]
        %v285 = vld [vmem:[%s277 + $0x28] sm:$0xff]
        %v286 = vld [vmem:[%s277 + $0x30] sm:$0xff]
        %v287 = vld [vmem:[%s277 + $0x38] sm:$0xff]
        %v288 = vld [vmem:[%s277 + $0x40] sm:$0xff]
        %v289 = vld [vmem:[%s277 + $0x48] sm:$0xff]
        %v290 = vld [vmem:[%s277 + $0x50] sm:$0xff]
        %v291 = vld [vmem:[%s277 + $0x58] sm:$0xff]
        %v292 = vld [vmem:[%s277 + $0x60] sm:$0xff]
        %v293 = vld [vmem:[%s277 + $0x68] sm:$0xff]
        %v294 = vld [vmem:[%s277 + $0x70] sm:$0xff]
        %v295 = vld [vmem:[%s277 + $0x78] sm:$0xff]
        %v296 = vpack.c.bf16 %v281, %v280
        %v297 = vpack.c.bf16 %v283, %v282
        %v298 = vpack.c.bf16 %v285, %v284
        %v299 = vpack.c.bf16 %v287, %v286
        %v300 = vpack.c.bf16 %v289, %v288
        %v301 = vpack.c.bf16 %v291, %v290
        %v302 = vpack.c.bf16 %v293, %v292
        %v303 = vpack.c.bf16 %v295, %v294
        %v304 = vld [vmem:[%s1] sm:$0xf]
        %v305 = vld [vmem:[%s1 + $0x4] sm:$0xf]
        %v306 = vld [vmem:[%s1 + $0x8] sm:$0xf]
        %v307 = vld [vmem:[%s1 + $0xc] sm:$0xf]
        %v308 = vld [vmem:[%s1 + $0x10] sm:$0xf]
        %v309 = vld [vmem:[%s1 + $0x14] sm:$0xf]
        %v310 = vld [vmem:[%s1 + $0x18] sm:$0xf]
        %v311 = vld [vmem:[%s1 + $0x1c] sm:$0xf]
        %v312 = vld [vmem:[%s1 + $0x20] sm:$0xf]
        %v313 = vld [vmem:[%s1 + $0x24] sm:$0xf]
        %v314 = vld [vmem:[%s1 + $0x28] sm:$0xf]
        %v315 = vld [vmem:[%s1 + $0x2c] sm:$0xf]
        %v316 = vld [vmem:[%s1 + $0x30] sm:$0xf]
        %v317 = vld [vmem:[%s1 + $0x34] sm:$0xf]
        %v318 = vld [vmem:[%s2] sm:$0xff]
        %v319 = vld [vmem:[%s2 + $0x8] sm:$0xff]
        %v320 = vld [vmem:[%s2 + $0x10] sm:$0xff]
        %v321 = vld [vmem:[%s2 + $0x18] sm:$0xff]
        %v322 = vld [vmem:[%s2 + $0x20] sm:$0xff]
        %v323 = vld [vmem:[%s2 + $0x28] sm:$0xff]
        %v324 = vld [vmem:[%s2 + $0x30] sm:$0xff]
        %v325 = vld [vmem:[%s2 + $0x38] sm:$0xff]
        %v326 = vld [vmem:[%s2 + $0x40] sm:$0xff]
        %v327 = vld [vmem:[%s2 + $0x48] sm:$0xff]
        %v328 = vld [vmem:[%s2 + $0x50] sm:$0xff]
        %v329 = vld [vmem:[%s2 + $0x58] sm:$0xff]
        %v330 = vld [vmem:[%s2 + $0x60] sm:$0xff]
        %v331 = vld [vmem:[%s2 + $0x68] sm:$0xff]
        %333 = vset.pattern.permute.xlu0 0
        %334 = vperm.xlu0 %333, %v318
        %v335 = vpop.permute.xlu0 %334
        %338 = vset.pattern.permute.xlu0 0
        %339 = vperm.xlu0 %338, %v319
        %v340 = vpop.permute.xlu0 %339
        %343 = vset.pattern.permute.xlu0 0
        %344 = vperm.xlu0 %343, %v320
        %v345 = vpop.permute.xlu0 %344
        %348 = vset.pattern.permute.xlu0 0
        %349 = vperm.xlu0 %348, %v321
        %v350 = vpop.permute.xlu0 %349
        %353 = vset.pattern.permute.xlu0 0
        %354 = vperm.xlu0 %353, %v322
        %v355 = vpop.permute.xlu0 %354
        %358 = vset.pattern.permute.xlu0 0
        %359 = vperm.xlu0 %358, %v323
        %v360 = vpop.permute.xlu0 %359
        %363 = vset.pattern.permute.xlu0 0
        %364 = vperm.xlu0 %363, %v324
        %v365 = vpop.permute.xlu0 %364
        %368 = vset.pattern.permute.xlu0 0
        %369 = vperm.xlu0 %368, %v325
        %v370 = vpop.permute.xlu0 %369
        %373 = vset.pattern.permute.xlu0 0
        %374 = vperm.xlu0 %373, %v326
        %v375 = vpop.permute.xlu0 %374
        %378 = vset.pattern.permute.xlu0 0
        %379 = vperm.xlu0 %378, %v327
        %v380 = vpop.permute.xlu0 %379
        %383 = vset.pattern.permute.xlu0 0
        %384 = vperm.xlu0 %383, %v328
        %v385 = vpop.permute.xlu0 %384
        %388 = vset.pattern.permute.xlu0 0
        %389 = vperm.xlu0 %388, %v329
        %v390 = vpop.permute.xlu0 %389
        %393 = vset.pattern.permute.xlu0 0
        %394 = vperm.xlu0 %393, %v330
        %v395 = vpop.permute.xlu0 %394
        %398 = vset.pattern.permute.xlu0 0
        %399 = vperm.xlu0 %398, %v331
        %v400 = vpop.permute.xlu0 %399
        %v416 = vunpack.c.l.b16 %v304
        %v417 = vunpack.c.l.b16 %v305
        %v418 = vunpack.c.l.b16 %v306
        %v419 = vunpack.c.l.b16 %v307
        %v420 = vunpack.c.l.b16 %v308
        %v421 = vunpack.c.l.b16 %v309
        %v422 = vunpack.c.l.b16 %v310
        %v423 = vunpack.c.l.b16 %v311
        %v424 = vunpack.c.l.b16 %v312
        %v425 = vunpack.c.l.b16 %v313
        %v426 = vunpack.c.l.b16 %v314
        %v427 = vunpack.c.l.b16 %v315
        %v428 = vunpack.c.l.b16 %v316
        %v429 = vunpack.c.l.b16 %v317
        %v430 = vpack.c.b16 %v417, %v416
        %v431 = vpack.c.b16 %v419, %v418
        %v432 = vpack.c.b16 %v421, %v420
        %v433 = vpack.c.b16 %v423, %v422
        %v434 = vpack.c.b16 %v425, %v424
        %v435 = vpack.c.b16 %v427, %v426
        %v436 = vpack.c.b16 %v429, %v428
        %vm437 = vcmask 138240
        %v439 = vsel %vm437, %v430, 0
        %v442 = vsel %vm437, %v431, 0
        %v445 = vsel %vm437, %v432, 0
        %v448 = vsel %vm437, %v433, 0
        %v451 = vsel %vm437, %v434, 0
        %v454 = vsel %vm437, %v435, 0
        %v457 = vsel %vm437, %v436, 0
        %v460 = vsel %vm437, %v296, 0
        %v463 = vsel %vm437, %v297, 0
        %v466 = vsel %vm437, %v298, 0
        %v469 = vsel %vm437, %v299, 0
        %v472 = vsel %vm437, %v300, 0
        %v475 = vsel %vm437, %v301, 0
        %v478 = vsel %vm437, %v302, 0
        %v481 = vsel %vm437, %v303, 0
        %483 = vmatprep.subr.bf16.mxu0 0
        %484 = vmatpush1.bf16.xpose.msra.mxu0 %v460
        %485 = vmatprep.subr.bf16.mxu0 0
        %486 = vmatpush1.bf16.xpose.msra.mxu0 %v463
        %487 = vmatprep.subr.bf16.mxu0 0
        %488 = vmatpush1.bf16.xpose.msra.mxu0 %v466
        %489 = vmatprep.subr.bf16.mxu0 0
        %490 = vmatpush1.bf16.xpose.msra.mxu0 %v469
        %491 = vmatprep.subr.bf16.mxu0 0
        %492 = vmatpush1.bf16.xpose.msra.mxu0 %v472
        %493 = vmatprep.subr.bf16.mxu0 0
        %494 = vmatpush1.bf16.xpose.msra.mxu0 %v475
        %495 = vmatprep.subr.bf16.mxu0 0
        %496 = vmatpush1.bf16.xpose.msra.mxu0 %v478
        %497 = vmatprep.subr.bf16.mxu0 0
        %498 = vmatpush1.bf16.xpose.msra.mxu0 %v481
        %499 = vmatprep.subr.bf16.mxu0 0
        %500 = vmatpush1.bf16.xpose.msra.mxu0 0
        %501 = vmatprep.subr.bf16.mxu0 0
        %502 = vmatpush1.bf16.xpose.msra.mxu0 0
        %503 = vmatprep.subr.bf16.mxu0 0
        %504 = vmatpush1.bf16.xpose.msra.mxu0 0
        %505 = vmatprep.subr.bf16.mxu0 0
        %506 = vmatpush1.bf16.xpose.msra.mxu0 0
        %507 = vmatprep.subr.bf16.mxu0 0
        %508 = vmatpush1.bf16.xpose.msra.mxu0 0
        %509 = vmatprep.subr.bf16.mxu0 0
        %510 = vmatpush1.bf16.xpose.msra.mxu0 0
        %511 = vmatprep.subr.bf16.mxu0 0
        %512 = vmatpush1.bf16.xpose.msra.mxu0 0
        %513 = vmatprep.subr.bf16.mxu0 0
        %514 = vmatpush1.bf16.xpose.msra.mxu0 0
        %515 = vmatprep.mubr.bf16.mxu0 0
        %516 = vmatmul.mubr.bf16.gmra.mrb[0].mxu0 %v439
        %v517 = vpop.f32.mrb[0].mxu0
        %v518 = vadd.f32 %v335, %v517
        %v519 = vpop.f32.mrb[0].mxu0
        %v520 = vpop.f32.mrb[0].mxu0
        %v521 = vadd.f32 %v340, %v520
        %v522 = vpop.f32.mrb[0].mxu0
        %523 = vmatprep.mubr.bf16.mxu0 0
        %524 = vmatmul.mubr.bf16.gmra.mrb[0].mxu0 %v442
        %v525 = vpop.f32.mrb[0].mxu0
        %v526 = vadd.f32 %v345, %v525
        %v527 = vpop.f32.mrb[0].mxu0
        %v528 = vpop.f32.mrb[0].mxu0
        %v529 = vadd.f32 %v350, %v528
        %v530 = vpop.f32.mrb[0].mxu0
        %531 = vmatprep.mubr.bf16.mxu0 0
        %532 = vmatmul.mubr.bf16.gmra.mrb[0].mxu0 %v445
        %v533 = vpop.f32.mrb[0].mxu0
        %v534 = vadd.f32 %v355, %v533
        %v535 = vpop.f32.mrb[0].mxu0
        %v536 = vpop.f32.mrb[0].mxu0
        %v537 = vadd.f32 %v360, %v536
        %v538 = vpop.f32.mrb[0].mxu0
        %539 = vmatprep.mubr.bf16.mxu0 0
        %540 = vmatmul.mubr.bf16.gmra.mrb[0].mxu0 %v448
        %v541 = vpop.f32.mrb[0].mxu0
        %v542 = vadd.f32 %v365, %v541
        %v543 = vpop.f32.mrb[0].mxu0
        %v544 = vpop.f32.mrb[0].mxu0
        %v545 = vadd.f32 %v370, %v544
        %v546 = vpop.f32.mrb[0].mxu0
        %547 = vmatprep.mubr.bf16.mxu0 0
        %548 = vmatmul.mubr.bf16.gmra.mrb[0].mxu0 %v451
        %v549 = vpop.f32.mrb[0].mxu0
        %v550 = vadd.f32 %v375, %v549
        %v551 = vpop.f32.mrb[0].mxu0
        %v552 = vpop.f32.mrb[0].mxu0
        %v553 = vadd.f32 %v380, %v552
        %v554 = vpop.f32.mrb[0].mxu0
        %555 = vmatprep.mubr.bf16.mxu0 0
        %556 = vmatmul.mubr.bf16.gmra.mrb[0].mxu0 %v454
        %v557 = vpop.f32.mrb[0].mxu0
        %v558 = vadd.f32 %v385, %v557
        %v559 = vpop.f32.mrb[0].mxu0
        %v560 = vpop.f32.mrb[0].mxu0
        %v561 = vadd.f32 %v390, %v560
        %v562 = vpop.f32.mrb[0].mxu0
        %563 = vmatprep.mubr.bf16.mxu0 0
        %564 = vmatmul.mubr.bf16.gmra.mrb[0].mxu0 %v457
        %v565 = vpop.f32.mrb[0].mxu0
        %v566 = vadd.f32 %v395, %v565
        %v567 = vpop.f32.mrb[0].mxu0
        %v568 = vpop.f32.mrb[0].mxu0
        %v569 = vadd.f32 %v400, %v568
        %v570 = vpop.f32.mrb[0].mxu0
        %571 = vdwg.mxu0
        %v572 = vmul.f32 %v518, 0.1
        %v573 = vmul.f32 %v521, 0.1
        %v574 = vmul.f32 %v526, 0.1
        %v575 = vmul.f32 %v529, 0.1
        %v576 = vmul.f32 %v534, 0.1
        %v577 = vmul.f32 %v537, 0.1
        %v578 = vmul.f32 %v542, 0.1
        %v579 = vmul.f32 %v545, 0.1
        %v580 = vmul.f32 %v550, 0.1
        %v581 = vmul.f32 %v553, 0.1
        %v582 = vmul.f32 %v558, 0.1
        %v583 = vmul.f32 %v561, 0.1
        %v584 = vmul.f32 %v566, 0.1
        %v585 = vmul.f32 %v569, 0.1
        %v586 = vmax.f32 %v518, %v572
        %v587 = vmax.f32 %v521, %v573
        %v588 = vmax.f32 %v526, %v574
        %v589 = vmax.f32 %v529, %v575
        %v590 = vmax.f32 %v534, %v576
        %v591 = vmax.f32 %v537, %v577
        %v592 = vmax.f32 %v542, %v578
        %v593 = vmax.f32 %v545, %v579
        %v594 = vmax.f32 %v550, %v580
        %v595 = vmax.f32 %v553, %v581
        %v596 = vmax.f32 %v558, %v582
        %v597 = vmax.f32 %v561, %v583
        %v598 = vmax.f32 %v566, %v584
        %v599 = vmax.f32 %v569, %v585
        %v600 = vld [vmem:[%s3] sm:$0xf]
        %v601 = vld [vmem:[%s3 + $0x4] sm:$0xf]
        %v602 = vld [vmem:[%s3 + $0x8] sm:$0xf]
        %v603 = vld [vmem:[%s3 + $0xc] sm:$0xf]
        %v604 = vld [vmem:[%s3 + $0x10] sm:$0xf]
        %v605 = vld [vmem:[%s3 + $0x14] sm:$0xf]
        %v606 = vld [vmem:[%s3 + $0x18] sm:$0xf]
        %v607 = vld [vmem:[%s3 + $0x1c] sm:$0xf]
        %v608 = vpack.c.bf16 %v587, %v586
        %v609 = vpack.c.bf16 %v589, %v588
        %v610 = vpack.c.bf16 %v591, %v590
        %v611 = vpack.c.bf16 %v593, %v592
        %v612 = vpack.c.bf16 %v595, %v594
        %v613 = vpack.c.bf16 %v597, %v596
        %v614 = vpack.c.bf16 %v599, %v598
        %v615 = vld [vmem:[%s4] sm:$0xff]
        %v616 = vld [vmem:[%s4 + $0x8] sm:$0xff]
        %v617 = vld [vmem:[%s4 + $0x10] sm:$0xff]
        %v618 = vld [vmem:[%s4 + $0x18] sm:$0xff]
        %v619 = vld [vmem:[%s4 + $0x20] sm:$0xff]
        %v620 = vld [vmem:[%s4 + $0x28] sm:$0xff]
        %v621 = vld [vmem:[%s4 + $0x30] sm:$0xff]
        %v622 = vld [vmem:[%s4 + $0x38] sm:$0xff]
        %624 = vset.pattern.permute.xlu0 0
        %625 = vperm.xlu0 %624, %v615
        %v626 = vpop.permute.xlu0 %625
        %629 = vset.pattern.permute.xlu0 0
        %630 = vperm.xlu0 %629, %v616
        %v631 = vpop.permute.xlu0 %630
        %634 = vset.pattern.permute.xlu0 0
        %635 = vperm.xlu0 %634, %v617
        %v636 = vpop.permute.xlu0 %635
        %639 = vset.pattern.permute.xlu0 0
        %640 = vperm.xlu0 %639, %v618
        %v641 = vpop.permute.xlu0 %640
        %644 = vset.pattern.permute.xlu0 0
        %645 = vperm.xlu0 %644, %v619
        %v646 = vpop.permute.xlu0 %645
        %649 = vset.pattern.permute.xlu0 0
        %650 = vperm.xlu0 %649, %v620
        %v651 = vpop.permute.xlu0 %650
        %654 = vset.pattern.permute.xlu0 0
        %655 = vperm.xlu0 %654, %v621
        %v656 = vpop.permute.xlu0 %655
        %659 = vset.pattern.permute.xlu0 0
        %660 = vperm.xlu0 %659, %v622
        %v661 = vpop.permute.xlu0 %660
        %v671 = vunpack.c.l.b16 %v600
        %v672 = vunpack.c.l.b16 %v601
        %v673 = vunpack.c.l.b16 %v602
        %v674 = vunpack.c.l.b16 %v603
        %v675 = vunpack.c.l.b16 %v604
        %v676 = vunpack.c.l.b16 %v605
        %v677 = vunpack.c.l.b16 %v606
        %v678 = vunpack.c.l.b16 %v607
        %v679 = vpack.c.b16 %v672, %v671
        %v680 = vpack.c.b16 %v674, %v673
        %v681 = vpack.c.b16 %v676, %v675
        %v682 = vpack.c.b16 %v678, %v677
        %vm683 = vcmask 916480
        %v685 = vsel %vm683, %v679, 0
        %v688 = vsel %vm683, %v680, 0
        %v691 = vsel %vm683, %v681, 0
        %v694 = vsel %vm683, %v682, 0
        %696 = vmatprep.subr.bf16.mxu0 0
        %697 = vmatpush1.bf16.msra.mxu0 %v608
        %698 = vmatprep.subr.bf16.mxu0 0
        %699 = vmatpush1.bf16.msra.mxu0 %v609
        %700 = vmatprep.subr.bf16.mxu0 0
        %701 = vmatpush1.bf16.msra.mxu0 %v610
        %702 = vmatprep.subr.bf16.mxu0 0
        %703 = vmatpush1.bf16.msra.mxu0 %v611
        %704 = vmatprep.subr.bf16.mxu0 0
        %705 = vmatpush1.bf16.msra.mxu0 %v612
        %706 = vmatprep.subr.bf16.mxu0 0
        %707 = vmatpush1.bf16.msra.mxu0 %v613
        %708 = vmatprep.subr.bf16.mxu0 0
        %709 = vmatpush1.bf16.msra.mxu0 %v614
        %710 = vmatprep.subr.bf16.mxu0 0
        %711 = vmatpush1.bf16.msra.mxu0 0
        %712 = vmatprep.subr.bf16.mxu0 0
        %713 = vmatpush1.bf16.msra.mxu0 0
        %714 = vmatprep.subr.bf16.mxu0 0
        %715 = vmatpush1.bf16.msra.mxu0 0
        %716 = vmatprep.subr.bf16.mxu0 0
        %717 = vmatpush1.bf16.msra.mxu0 0
        %718 = vmatprep.subr.bf16.mxu0 0
        %719 = vmatpush1.bf16.msra.mxu0 0
        %720 = vmatprep.subr.bf16.mxu0 0
        %721 = vmatpush1.bf16.msra.mxu0 0
        %722 = vmatprep.subr.bf16.mxu0 0
        %723 = vmatpush1.bf16.msra.mxu0 0
        %724 = vmatprep.subr.bf16.mxu0 0
        %725 = vmatpush1.bf16.msra.mxu0 0
        %726 = vmatprep.subr.bf16.mxu0 0
        %727 = vmatpush1.bf16.msra.mxu0 0
        %728 = vmatprep.mubr.bf16.mxu0 0
        %729 = vmatmul.mubr.bf16.gmra.mrb[0].mxu0 %v685
        %v730 = vpop.f32.mrb[0].mxu0
        %v731 = vadd.f32 %v626, %v730
        %v732 = vpop.f32.mrb[0].mxu0
        %v733 = vpop.f32.mrb[0].mxu0
        %v734 = vadd.f32 %v631, %v733
        %v735 = vpop.f32.mrb[0].mxu0
        %736 = vmatprep.mubr.bf16.mxu0 0
        %737 = vmatmul.mubr.bf16.gmra.mrb[0].mxu0 %v688
        %v738 = vpop.f32.mrb[0].mxu0
        %v739 = vadd.f32 %v636, %v738
        %v740 = vpop.f32.mrb[0].mxu0
        %v741 = vpop.f32.mrb[0].mxu0
        %v742 = vadd.f32 %v641, %v741
        %v743 = vpop.f32.mrb[0].mxu0
        %744 = vmatprep.mubr.bf16.mxu0 0
        %745 = vmatmul.mubr.bf16.gmra.mrb[0].mxu0 %v691
        %v746 = vpop.f32.mrb[0].mxu0
        %v747 = vadd.f32 %v646, %v746
        %v748 = vpop.f32.mrb[0].mxu0
        %v749 = vpop.f32.mrb[0].mxu0
        %v750 = vadd.f32 %v651, %v749
        %v751 = vpop.f32.mrb[0].mxu0
        %752 = vmatprep.mubr.bf16.mxu0 0
        %753 = vmatmul.mubr.bf16.gmra.mrb[0].mxu0 %v694
        %v754 = vpop.f32.mrb[0].mxu0
        %v755 = vadd.f32 %v656, %v754
        %v756 = vpop.f32.mrb[0].mxu0
        %v757 = vpop.f32.mrb[0].mxu0
        %v758 = vadd.f32 %v661, %v757
        %v759 = vpop.f32.mrb[0].mxu0
        %760 = vdwg.mxu0
        %v761 = vmul.f32 %v731, 0.1
        %v762 = vmul.f32 %v734, 0.1
        %v763 = vmul.f32 %v739, 0.1
        %v764 = vmul.f32 %v742, 0.1
        %v765 = vmul.f32 %v747, 0.1
        %v766 = vmul.f32 %v750, 0.1
        %v767 = vmul.f32 %v755, 0.1
        %v768 = vmul.f32 %v758, 0.1
        %v769 = vmax.f32 %v731, %v761
        %v770 = vmax.f32 %v734, %v762
        %v771 = vmax.f32 %v739, %v763
        %v772 = vmax.f32 %v742, %v764
        %v773 = vmax.f32 %v747, %v765
        %v774 = vmax.f32 %v750, %v766
        %v775 = vmax.f32 %v755, %v767
        %v776 = vmax.f32 %v758, %v768
        %v777 = vld [vmem:[%s5] sm:$0xff]
        %v778 = vld [vmem:[%s5 + $0x8] sm:$0xff]
        %v779 = vld [vmem:[%s5 + $0x10] sm:$0xff]
        %v780 = vld [vmem:[%s5 + $0x18] sm:$0xff]
        %v781 = vld [vmem:[%s5 + $0x20] sm:$0xff]
        %v782 = vld [vmem:[%s5 + $0x28] sm:$0xff]
        %v783 = vld [vmem:[%s5 + $0x30] sm:$0xff]
        %v784 = vld [vmem:[%s5 + $0x38] sm:$0xff]
        %786 = vset.pattern.permute.xlu0 0
        %787 = vperm.xlu0 %786, %v777
        %v788 = vpop.permute.xlu0 %787
        %791 = vset.pattern.permute.xlu0 0
        %792 = vperm.xlu0 %791, %v778
        %v793 = vpop.permute.xlu0 %792
        %796 = vset.pattern.permute.xlu0 0
        %797 = vperm.xlu0 %796, %v779
        %v798 = vpop.permute.xlu0 %797
        %801 = vset.pattern.permute.xlu0 0
        %802 = vperm.xlu0 %801, %v780
        %v803 = vpop.permute.xlu0 %802
        %806 = vset.pattern.permute.xlu0 0
        %807 = vperm.xlu0 %806, %v781
        %v808 = vpop.permute.xlu0 %807
        %811 = vset.pattern.permute.xlu0 0
        %812 = vperm.xlu0 %811, %v782
        %v813 = vpop.permute.xlu0 %812
        %816 = vset.pattern.permute.xlu0 0
        %817 = vperm.xlu0 %816, %v783
        %v818 = vpop.permute.xlu0 %817
        %821 = vset.pattern.permute.xlu0 0
        %822 = vperm.xlu0 %821, %v784
        %v823 = vpop.permute.xlu0 %822
        %v825 = vmul.f32 %v769, %v788
        %v826 = vmul.f32 %v770, %v793
        %v827 = vmul.f32 %v771, %v798
        %v828 = vmul.f32 %v772, %v803
        %v829 = vmul.f32 %v773, %v808
        %v830 = vmul.f32 %v774, %v813
        %v831 = vmul.f32 %v775, %v818
        %v832 = vmul.f32 %v776, %v823
        %v833 = vadd.f32 %v825, %v826
        %v834 = vadd.f32 %v833, %v827
        %v835 = vadd.f32 %v834, %v828
        %v836 = vadd.f32 %v835, %v829
        %v837 = vadd.f32 %v836, %v830
        %v838 = vadd.f32 %v837, %v831
        %v839 = vadd.f32 %v838, %v832
        %v840 = vrot.slane %v839, 4
        %v841 = vadd.f32 %v839, %v840
        %v842 = vrot.slane %v841, 2
        %v843 = vadd.f32 %v841, %v842
        %v844 = vrot.slane %v843, 1
        %v845 = vadd.f32 %v843, %v844
        %s846 = sld [smem:[#allocation2]]
        %v847 = vstv %s846
        %v848 = vadd.f32 %v845, %v847
        %849 = vst [vmem:[%s272] sm:$0x1] %v848
        %s850 = sand.u32 %s182, 1
        %s851 = scalar_lea.sflag [#allocation4], %s850
        %s852 = sand.u32 %s182, 1
        %s853 = scalar_lea.vmem [#allocation3], %s852
        // Predicated region
        $region49: #{tpu_custom_call.1} parent=47 // pred_check
          %p854 = pneg %p192
        $region50: #{tpu_custom_call.1} parent=47 // pred_check_branch
          %856 = sbr.rel (%p854) target = $region52
        $region51: #{tpu_custom_call.1} parent=47 // pred_region
          %s858 = ssub.s32 16, 16
          %859 = vsyncadd %s851, %s858
          %s860 = smul.addr %s22, 16
          %s861 = scalar_lea.hbm %s7, %s860
          %s863 = sshll.u32 %s853, 4
          %s864 = int_to_ptr.vmem [resolvable:$true] %s863
          %866 = dma.vmem_to_hbm [thread:$0]  %s864, 16, %s861, %s851
        $region52: #{tpu_custom_call.1} parent=47 // pred_fallthru
          _
      $region48: #{tpu_custom_call.1} parent=5 // pred_fallthru
        _
      %p867 = scmp.le.s32.totalorder 2, %s17
      // Predicated region
      $region53: #{tpu_custom_call.1} parent=5 // pred_check
        %p868 = pneg %p867
      $region54: #{tpu_custom_call.1} parent=5 // pred_check_branch
        %870 = sbr.rel (%p868) target = $region56
      $region55: #{tpu_custom_call.1} parent=5 // pred_region
        %s871 = ssub.s32 %s17, 2
        // Predicated region
        $region57: #{tpu_custom_call.1} parent=55 // pred_check
          %p872 = pneg %p198
        $region58: #{tpu_custom_call.1} parent=55 // pred_check_branch
          %874 = sbr.rel (%p872) target = $region60
        $region59: #{tpu_custom_call.1} parent=55 // pred_region
          %s875 = sand.u32 %s183, 1
          %s876 = scalar_lea.sflag [#allocation4], %s875
          %s877 = sand.u32 %s183, 1
          %s878 = scalar_lea.vmem [#allocation3], %s877
          %879 = dma.done %s876, 16
        $region60: #{tpu_custom_call.1} parent=55 // pred_fallthru
          _
      $region56: #{tpu_custom_call.1} parent=5 // pred_fallthru
        _
    $region6: #{tpu_custom_call.1} parent=1 // loop_footer
      %s21 = sadd.s32 1, %s17
    $region7: #{tpu_custom_call.1} parent=1 // loop_footer_branch
      %16 = sbr.rel target = $region3
    $region8: #{tpu_custom_call.1} parent=1 // loop_exit
      _
    %880 = vsyncpa [#allocation4], 1
    %s881 = scalar_lea.sflag [#allocation4], 1
    %882 = vsyncpa %s881, 1

</llo_original>
